<compile_context>
chip_gen: v7x
topology: tpu7x:2x2x1
jax: 0.10.0
libtpu: 0.0.40
codegen_flags: <defaults>
</compile_context>

<pallas_src>
import numpy as np
import jax
import jax.numpy as jnp
from jax.experimental import pallas as pl
from jax.experimental.pallas import tpu as pltpu


def _round_up(x, m):
    return ((x + m - 1) // m) * m


def stacked_gru_kernel(x_ref, h0_ref, w_ref, b_ref, hs_ref, lhs_ref):
    """One torch.nn.GRUCell layer per grid step (grid axis 0 = layer).

    x_ref   : (Bp, Dp)          padded step input (only read at layer 0)
    h0_ref  : (1, Bp, Hp)       this layer's padded initial hidden state (f32)
    w_ref   : (1, Dp+Hp, 4*Hp)  bf16 combined weights, cols = [r | z | n_ih | n_hh]
    b_ref   : (1, 1, 4*Hp)      f32 merged biases
    hs_ref  : (1, Bp, Hp)       output: this layer's new hidden state
    lhs_ref : (Bp, Dp+Hp)       persistent VMEM scratch; [:, :Dp] running layer
                                input, [:, Dp:] this layer's h.
    """
    layer = pl.program_id(0)
    hp = h0_ref.shape[-1]
    dp = x_ref.shape[-1]

    @pl.when(layer == 0)
    def _():
        lhs_ref[:, 0:dp] = x_ref[...]

    h = h0_ref[0]                                      # (Bp, Hp) f32
    lhs_ref[:, dp:] = h

    # Single fused matmul per layer: bf16 x bf16 on the MXU, f32 accumulation.
    g = jnp.dot(lhs_ref[...].astype(jnp.bfloat16), w_ref[0],
                preferred_element_type=jnp.float32) + b_ref[0]   # (Bp, 4*Hp)

    r = jax.nn.sigmoid(g[:, 0 * hp:1 * hp])
    z = jax.nn.sigmoid(g[:, 1 * hp:2 * hp])
    n = jnp.tanh(g[:, 2 * hp:3 * hp] + r * g[:, 3 * hp:4 * hp])
    h_new = (1.0 - z) * n + z * h                      # (Bp, Hp)
    hs_ref[0] = h_new

    # Feed h_new forward as the next layer's input.  h_new's padded lanes
    # [H:Hp] are exactly zero (h0 is zero-padded), and for layers >= 1 the
    # packed weight rows [H:Dp] are zero, so any stale scratch lanes in
    # [Hp:Dp] contribute nothing to the next matmul.
    @pl.when(layer < pl.num_programs(0) - 1)
    def _():
        lhs_ref[:, 0:hp] = h_new


def pack_params(params, input_size, rnn_size):
    """Pad, gate-concatenate and layer-stack torch-layout GRUCell weights.

    Returns:
      w_all: (L, Dp+Hp, 4*Hp) bfloat16. Contraction rows = [input | hidden],
             gate column blocks = [r | z | n_ih | n_hh].
      b_all: (L, 1, 4*Hp) float32 = [b_ih_r+b_hh_r | b_ih_z+b_hh_z | b_ih_n | b_hh_n].
    """
    L = len(params)
    H = rnn_size
    Hp = _round_up(H, 128)
    Dp = max(_round_up(input_size, 128), Hp)
    K = Dp + Hp

    w_all = np.zeros((L, K, 4 * Hp), np.float32)
    b_all = np.zeros((L, 1, 4 * Hp), np.float32)

    d_in = input_size
    for l, (w_ih, w_hh, b_ih, b_hh) in enumerate(params):
        w_ih = np.asarray(w_ih, np.float32)
        w_hh = np.asarray(w_hh, np.float32)
        b_ih = np.asarray(b_ih, np.float32)
        b_hh = np.asarray(b_hh, np.float32)
        for g in range(2):  # r, z: input and hidden share one column block
            w_all[l, :d_in, g * Hp:g * Hp + H] = w_ih[g]
            w_all[l, Dp:Dp + H, g * Hp:g * Hp + H] = w_hh[g]
            b_all[l, 0, g * Hp:g * Hp + H] = b_ih[g, 0] + b_hh[g, 0]
        # n gate: input/hidden parts in separate column blocks so the kernel
        # can apply r only to the hidden part (torch GRUCell semantics).
        w_all[l, :d_in, 2 * Hp:2 * Hp + H] = w_ih[2]
        w_all[l, Dp:Dp + H, 3 * Hp:3 * Hp + H] = w_hh[2]
        b_all[l, 0, 2 * Hp:2 * Hp + H] = b_ih[2, 0]
        b_all[l, 0, 3 * Hp:3 * Hp + H] = b_hh[2, 0]
        d_in = H  # layers >= 1 take the previous hidden state as input

    return jnp.asarray(w_all, jnp.bfloat16), jnp.asarray(b_all, jnp.float32)


@jax.jit
def stacked_gru_cell(x, hidden, w_all, b_all):
    """Forward of StackedGRUCell (eval / dropout p=0).

    x:      (B, input_size)
    hidden: (num_layers, B, rnn_size)
    returns (input_out, hs) with hs of shape (num_layers, B, rnn_size).
    """
    # TODO(synk): inter-layer dropout (training mode, p > 0) not implemented;
    # eval / p = 0 dropout is the identity, which is what is computed here.
    B, d_in = x.shape
    L, _, H = hidden.shape
    K = w_all.shape[1]
    Hp = w_all.shape[2] // 4
    Dp = K - Hp
    Bp = _round_up(B, 8)

    xp = jnp.zeros((Bp, Dp), jnp.float32).at[:B, :d_in].set(x.astype(jnp.float32))
    h0 = jnp.zeros((L, Bp, Hp), jnp.float32).at[:, :B, :H].set(
        hidden.astype(jnp.float32))

    # Size the scoped VMEM limit from the actual (double-buffered) blocks.
    w_bytes = K * 4 * Hp * 2          # bf16 weights, per layer block
    x_bytes = Bp * Dp * 4
    h_bytes = Bp * Hp * 4
    b_bytes = 4 * Hp * 4
    o_bytes = Bp * Hp * 4
    s_bytes = Bp * K * 4
    vmem_limit = 2 * (w_bytes + x_bytes + h_bytes + b_bytes + o_bytes) + s_bytes
    vmem_limit = int(min(vmem_limit + (4 << 20), 64 << 20))

    hs_pad = pl.pallas_call(
        stacked_gru_kernel,
        out_shape=jax.ShapeDtypeStruct((L, Bp, Hp), jnp.float32),
        grid_spec=pltpu.PrefetchScalarGridSpec(
            num_scalar_prefetch=0,
            grid=(L,),
            in_specs=[
                pl.BlockSpec((Bp, Dp), lambda l: (0, 0)),
                pl.BlockSpec((1, Bp, Hp), lambda l: (l, 0, 0)),
                pl.BlockSpec((1, K, 4 * Hp), lambda l: (l, 0, 0)),
                pl.BlockSpec((1, 1, 4 * Hp), lambda l: (l, 0, 0)),
            ],
            out_specs=pl.BlockSpec((1, Bp, Hp), lambda l: (l, 0, 0)),
            scratch_shapes=[pltpu.VMEM((Bp, K), jnp.float32)],
        ),
        compiler_params=pltpu.CompilerParams(
            dimension_semantics=("arbitrary",),
            vmem_limit_bytes=vmem_limit,
        ),
    )(xp, h0, w_all, b_all)

    hs = hs_pad[:, :B, :H].astype(x.dtype)
    # TODO(synk): when used inside a per-timestep scan, keep hidden in the
    # padded (L, Bp, Hp) layout across steps and fuse the time loop (grid over
    # T with layer inner) so weights are loaded once instead of once per step.
    return hs[-1], hs


def init_params(key, num_layers, input_size, rnn_size, dtype=jnp.float32):
    """Per-layer torch.nn.GRUCell-style weights (pre-transposed, split per gate)."""
    params = []
    d_in = input_size
    for _ in range(num_layers):
        key, k1, k2, k3, k4 = jax.random.split(key, 5)
        bound = 1.0 / jnp.sqrt(rnn_size)
        w_ih = jax.random.uniform(k1, (3, d_in, rnn_size), dtype, -bound, bound)
        w_hh = jax.random.uniform(k2, (3, rnn_size, rnn_size), dtype, -bound, bound)
        b_ih = jax.random.uniform(k3, (3, 1, rnn_size), dtype, -bound, bound)
        b_hh = jax.random.uniform(k4, (3, 1, rnn_size), dtype, -bound, bound)
        params.append((w_ih, w_hh, b_ih, b_hh))
        d_in = rnn_size
    return params


def stacked_gru_cell_ref(x, hidden, params, weight_dtype=jnp.float32,
                         act_dtype=jnp.float32):
    """Pure-JAX reference (torch GRUCell math).  Optional weight/activation
    quantization so the kernel can be checked at matched precision."""
    def q(a, dt):
        return a.astype(dt).astype(jnp.float32)

    inp = x.astype(jnp.float32)
    hs = []
    for layer_idx, (w_ih, w_hh, b_ih, b_hh) in enumerate(params):
        h = hidden[layer_idx].astype(jnp.float32)
        inp_q, h_q = q(inp, act_dtype), q(h, act_dtype)
        gi = [inp_q @ q(w_ih[k], weight_dtype) + b_ih[k] for k in range(3)]
        gh = [h_q @ q(w_hh[k], weight_dtype) + b_hh[k] for k in range(3)]
        r = jax.nn.sigmoid(gi[0] + gh[0])
        z = jax.nn.sigmoid(gi[1] + gh[1])
        n = jnp.tanh(gi[2] + r * gh[2])
        h_i = (1.0 - z) * n + z * h
        inp = h_i
        hs.append(h_i)
    return inp, jnp.stack(hs)


if __name__ == "__main__":
    num_layers = 3
    input_size = 48
    rnn_size = 32
    batch = 4

    key = jax.random.PRNGKey(0)
    kx, kh, kp = jax.random.split(key, 3)
    x = jax.random.normal(kx, (batch, input_size), jnp.float32)
    hidden = jax.random.normal(kh, (num_layers, batch, rnn_size), jnp.float32)
    params = init_params(kp, num_layers, input_size, rnn_size)
    w_all, b_all = pack_params(params, input_size, rnn_size)   # once, host-side

    out, hs = stacked_gru_cell(x, hidden, w_all, b_all)
    out = jax.block_until_ready(out)
    hs = jax.block_until_ready(hs)

    assert out.shape == (batch, rnn_size)
    assert hs.shape == (num_layers, batch, rnn_size)

    # 1) Matched-precision reference (bf16 weights/activations into the
    #    matmuls, f32 elsewhere): checks the kernel math itself.
    out_q, hs_q = stacked_gru_cell_ref(x, hidden, params,
                                       weight_dtype=jnp.bfloat16,
                                       act_dtype=jnp.bfloat16)
    assert jnp.max(jnp.abs(out - out_q)) < 2e-3
    assert jnp.max(jnp.abs(hs - hs_q)) < 2e-3

    # 2) Full-f32 reference: bounds the intentional bf16 weight quantization.
    out_f, hs_f = stacked_gru_cell_ref(x, hidden, params)
    assert jnp.max(jnp.abs(out - out_f)) < 1e-1
    assert jnp.max(jnp.abs(hs - hs_f)) < 1e-1

    print("KERNEL_OK")
</pallas_src>

<mosaic_0001>
module attributes {stable_mosaic.version = 11 : i64} {
  func.func @stacked_gru_kernel(%arg0: i32, %arg1: memref<8x128xf32, #tpu.memory_space<vmem>>, %arg2: memref<1x8x128xf32, #tpu.memory_space<vmem>>, %arg3: memref<1x256x512xbf16, #tpu.memory_space<vmem>>, %arg4: memref<1x1x512xf32, #tpu.memory_space<vmem>>, %arg5: memref<1x8x128xf32, #tpu.memory_space<vmem>>, %arg6: memref<8x256xf32, #tpu.memory_space<vmem>>) attributes {dimension_semantics = [#tpu.dimension_semantics<arbitrary>], iteration_bounds = array<i64: 3>, scalar_prefetch = 0 : i64, scratch_operands = 1 : i64, tpu.core_type = #tpu.core_type<tc>, window_params = [{pipeline_mode = #tpu.pipeline_mode<synchronous>, transform_indices = @transform_0, window_bounds = array<i64: 8, 128>}, {transform_indices = @transform_1, window_bounds = array<i64: 1, 8, 128>}, {transform_indices = @transform_2, window_bounds = array<i64: 1, 256, 512>}, {transform_indices = @transform_3, window_bounds = array<i64: 1, 1, 512>}, {transform_indices = @transform_4, window_bounds = array<i64: 1, 8, 128>}]} {
    %c0_i32 = arith.constant 0 : i32
    %0 = arith.cmpi eq, %arg0, %c0_i32 : i32
    %1 = arith.extui %0 : i1 to i32
    %c0_i32_0 = arith.constant 0 : i32
    %2 = arith.cmpi ne, %1, %c0_i32_0 : i32
    scf.if %2 {
      %c0_19 = arith.constant 0 : index
      %c0_20 = arith.constant 0 : index
      %43 = vector.load %arg1[%c0_19, %c0_20] : memref<8x128xf32, #tpu.memory_space<vmem>>, vector<8x128xf32>
      %c0_21 = arith.constant 0 : index
      %c0_22 = arith.constant 0 : index
      %44 = vector.load %arg6[%c0_21, %c0_22] : memref<8x256xf32, #tpu.memory_space<vmem>>, vector<8x128xf32>
      tpu.vector_store %arg6[%c0_21, %c0_22], %43 {strides = array<i32>} : memref<8x256xf32, #tpu.memory_space<vmem>>, vector<8x128xf32>,
    } else {
    }
    %c0 = arith.constant 0 : index
    %c0_1 = arith.constant 0 : index
    %c0_2 = arith.constant 0 : index
    %3 = vector.load %arg2[%c0, %c0_1, %c0_2] : memref<1x8x128xf32, #tpu.memory_space<vmem>>, vector<1x8x128xf32>
    %4 = vector.shape_cast %3 : vector<1x8x128xf32> to vector<8x128xf32>
    %c0_3 = arith.constant 0 : index
    %c128 = arith.constant 128 : index
    %5 = vector.load %arg6[%c0_3, %c128] : memref<8x256xf32, #tpu.memory_space<vmem>>, vector<8x128xf32>
    tpu.vector_store %arg6[%c0_3, %c128], %4 {strides = array<i32>} : memref<8x256xf32, #tpu.memory_space<vmem>>, vector<8x128xf32>,
    %c0_4 = arith.constant 0 : index
    %c0_5 = arith.constant 0 : index
    %6 = vector.load %arg6[%c0_4, %c0_5] : memref<8x256xf32, #tpu.memory_space<vmem>>, vector<8x256xf32>
    %7 = arith.truncf %6 : vector<8x256xf32> to vector<8x256xbf16>
    %c0_6 = arith.constant 0 : index
    %c0_7 = arith.constant 0 : index
    %c0_8 = arith.constant 0 : index
    %8 = vector.load %arg3[%c0_6, %c0_7, %c0_8] : memref<1x256x512xbf16, #tpu.memory_space<vmem>>, vector<1x256x512xbf16>
    %9 = vector.shape_cast %8 : vector<1x256x512xbf16> to vector<256x512xbf16>
    %cst = arith.constant dense<0.000000e+00> : vector<8x512xf32>
    %10 = tpu.matmul %7, %9, %cst {dimension_numbers = #tpu.dot_dimension_numbers<[1], [0], [0], [1], [0, 0, 1, 1], [], []>} : vector<8x256xbf16>, vector<256x512xbf16>, vector<8x512xf32> -> vector<8x512xf32>
    %c0_9 = arith.constant 0 : index
    %c0_10 = arith.constant 0 : index
    %c0_11 = arith.constant 0 : index
    %11 = vector.load %arg4[%c0_9, %c0_10, %c0_11] : memref<1x1x512xf32, #tpu.memory_space<vmem>>, vector<1x1x512xf32>
    %12 = vector.shape_cast %11 : vector<1x1x512xf32> to vector<1x512xf32>
    %13 = vector.broadcast %12 : vector<1x512xf32> to vector<8x512xf32>
    %14 = arith.addf %10, %13 : vector<8x512xf32>
    %15 = vector.extract_strided_slice %14 {offsets = [0, 0], sizes = [8, 128], strides = [1, 1]} : vector<8x512xf32> to vector<8x128xf32>
    %16 = arith.negf %15 : vector<8x128xf32>
    %17 = math.exp %16 : vector<8x128xf32>
    %cst_12 = arith.constant 1.000000e+00 : f32
    %18 = vector.broadcast %cst_12 : f32 to vector<8x128xf32>
    %19 = arith.addf %18, %17 : vector<8x128xf32>
    %20 = arith.divf %18, %19 : vector<8x128xf32>
    %21 = vector.extract_strided_slice %14 {offsets = [0, 128], sizes = [8, 128], strides = [1, 1]} : vector<8x512xf32> to vector<8x128xf32>
    %22 = arith.negf %21 : vector<8x128xf32>
    %23 = math.exp %22 : vector<8x128xf32>
    %cst_13 = arith.constant 1.000000e+00 : f32
    %24 = vector.broadcast %cst_13 : f32 to vector<8x128xf32>
    %25 = arith.addf %24, %23 : vector<8x128xf32>
    %26 = arith.divf %24, %25 : vector<8x128xf32>
    %27 = vector.extract_strided_slice %14 {offsets = [0, 256], sizes = [8, 128], strides = [1, 1]} : vector<8x512xf32> to vector<8x128xf32>
    %28 = vector.extract_strided_slice %14 {offsets = [0, 384], sizes = [8, 128], strides = [1, 1]} : vector<8x512xf32> to vector<8x128xf32>
    %29 = arith.mulf %20, %28 : vector<8x128xf32>
    %30 = arith.addf %27, %29 : vector<8x128xf32>
    %31 = math.tanh %30 : vector<8x128xf32>
    %cst_14 = arith.constant 1.000000e+00 : f32
    %32 = vector.broadcast %cst_14 : f32 to vector<8x128xf32>
    %33 = arith.subf %32, %26 : vector<8x128xf32>
    %34 = arith.mulf %33, %31 : vector<8x128xf32>
    %35 = arith.mulf %26, %4 : vector<8x128xf32>
    %36 = arith.addf %34, %35 : vector<8x128xf32>
    %c0_15 = arith.constant 0 : index
    %c0_16 = arith.constant 0 : index
    %c0_17 = arith.constant 0 : index
    %37 = vector.load %arg5[%c0_15, %c0_16, %c0_17] : memref<1x8x128xf32, #tpu.memory_space<vmem>>, vector<1x8x128xf32>
    %38 = vector.shape_cast %37 : vector<1x8x128xf32> to vector<8x128xf32>
    %39 = vector.shape_cast %36 : vector<8x128xf32> to vector<1x8x128xf32>
    tpu.vector_store %arg5[%c0_15, %c0_16, %c0_17], %39 {strides = array<i32>} : memref<1x8x128xf32, #tpu.memory_space<vmem>>, vector<1x8x128xf32>,
    %c2_i32 = arith.constant 2 : i32
    %40 = arith.cmpi slt, %arg0, %c2_i32 : i32
    %41 = arith.extui %40 : i1 to i32
    %c0_i32_18 = arith.constant 0 : i32
    %42 = arith.cmpi ne, %41, %c0_i32_18 : i32
    scf.if %42 {
      %c0_19 = arith.constant 0 : index
      %c0_20 = arith.constant 0 : index
      %43 = vector.load %arg6[%c0_19, %c0_20] : memref<8x256xf32, #tpu.memory_space<vmem>>, vector<8x128xf32>
      tpu.vector_store %arg6[%c0_19, %c0_20], %36 {strides = array<i32>} : memref<8x256xf32, #tpu.memory_space<vmem>>, vector<8x128xf32>,
    } else {
    }
    return
  }
  func.func @transform_0(%arg0: i32) -> (i32, i32) {
    %c0_i32 = arith.constant 0 : i32
    %c0_i32_0 = arith.constant 0 : i32
    %c0_i32_1 = arith.constant 0 : i32
    return %c0_i32, %c0_i32_0 : i32, i32
  }
  func.func @transform_1(%arg0: i32) -> (i32, i32, i32) {
    %c0_i32 = arith.constant 0 : i32
    %c0_i32_0 = arith.constant 0 : i32
    %c0_i32_1 = arith.constant 0 : i32
    return %arg0, %c0_i32, %c0_i32_0 : i32, i32, i32
  }
  func.func @transform_2(%arg0: i32) -> (i32, i32, i32) {
    %c0_i32 = arith.constant 0 : i32
    %c0_i32_0 = arith.constant 0 : i32
    %c0_i32_1 = arith.constant 0 : i32
    return %arg0, %c0_i32, %c0_i32_0 : i32, i32, i32
  }
  func.func @transform_3(%arg0: i32) -> (i32, i32, i32) {
    %c0_i32 = arith.constant 0 : i32
    %c0_i32_0 = arith.constant 0 : i32
    %c0_i32_1 = arith.constant 0 : i32
    return %arg0, %c0_i32, %c0_i32_0 : i32, i32, i32
  }
  func.func @transform_4(%arg0: i32) -> (i32, i32, i32) {
    %c0_i32 = arith.constant 0 : i32
    %c0_i32_0 = arith.constant 0 : i32
    %c0_i32_1 = arith.constant 0 : i32
    return %arg0, %c0_i32, %c0_i32_0 : i32, i32, i32
  }
}

</mosaic_0001>

<llo_original>
// kernel: stacked_gru_cell.1
$region0: #{stacked_gru_cell.1}
  #allocation0 [shape = 'u32[]', space=smem, size = 0x4, offset = 0x4, fixed_abs, tag = 'smem constant byte address 0x4 - core index']
  #allocation1 [shape = 'u32[144,128]{1,0:T(1,128)}', space=vmem, size = 0x12000, scoped, tag = 'internal scratch']
  #allocation2 [shape = 'f32[8,256]{1,0:T(8,128)}', space=vmem, size = 0x2000, scoped, tag = 'scratch operand']
  %s0 = inlined_call_operand.vmem [shape: f32[8,128], index: 0, kind: input, shape index: {}]
  %s1 = inlined_call_operand.vmem [shape: f32[3,8,128], index: 1, kind: input, shape index: {}]
  %s2 = inlined_call_operand.hbm [shape: bf16[3,256,512], index: 2, kind: input, shape index: {}]
  %s3 = inlined_call_operand.vmem [shape: f32[3,1,512], index: 3, kind: input, shape index: {}]
  %s4 = inlined_call_operand.vmem [shape: f32[3,8,128], index: 4, kind: output, shape index: {}]
  %s5 = sld [smem:[#allocation0]]
  $region61: #{stacked_gru_cell.1} parent=0
    _
  %s7 = ssub.s32 1, %s5
  %s8 = scalar_select 0, %s7, %s5
  $region1: #{stacked_gru_cell.1} parent=0
    #allocation3 [shape = 'u8[524288]{0}', space=vmem, size = 0x80000, scoped, tag = 'input window, operand 2']
    #allocation4 [shape = 's32[2]{0}', space=sflag, size = 0x8, scoped, tag = 'scoped memory for stacked_gru_cell.1']
    %9 = vsyncpa [#allocation4], 0
    %s10 = scalar_lea.sflag [#allocation4], 1
    %11 = vsyncpa %s10, 0
    loop: start=0, step=1, limit=5
    $region2: #{stacked_gru_cell.1} parent=1 // loop_pre_header
      _
    $region3: #{stacked_gru_cell.1} parent=1 // loop_header
      %s13 = sphi 0, %s17
      %p14 = scmp.ge.s32.totalorder %s13, 5
      %s21 = sphi 0, %s21
      %s23 = sphi 0, %s21
      %s24 = sphi 0, %s23
      %s38 = sphi 0, %s24
      %s44 = sphi 0, %s46
      %s47 = sphi 0, %s44
      %s48 = sphi 0, %s47
      %s64 = sphi 0, %s48
      %s70 = sphi 0, %s72
      %s73 = sphi 0, %s70
      %s74 = sphi 0, %s73
      %s90 = sphi 0, %s74
      %s96 = sphi 0, %s98
      %s99 = sphi 0, %s96
      %s100 = sphi 0, %s99
      %s116 = sphi 0, %s100
      %s122 = sphi 0, %s124
      %s125 = sphi 0, %s122
      %s126 = sphi 0, %s125
      %s142 = sphi 0, %s126
    $region4: #{stacked_gru_cell.1} parent=1 // loop_header_branch
      %16 = sbr.rel (%p14) target = $region8
    $region5: #{stacked_gru_cell.1} parent=1 // loop_body
      %s18 = ssub.s32 %s13, 1
      %s19 = ssub.s32 %s13, 2
      %s20 = sadd.s32 %s13, 1
      %s22 = sadd.s32 %s21, 1
      %p25 = scmp.eq.s32.totalorder %s13, 2
      %p26 = scmp.ne.s32.totalorder %s21, %s23
      %p27 = scmp.eq.s32.totalorder %s13, 0
      %p28 = por %p26, %p27
      %p29 = scmp.ne.s32.totalorder %s21, %s23
      %p30 = scmp.eq.s32.totalorder %s18, 2
      %p31 = por %p29, %p30
      %p32 = scmp.ne.s32.totalorder %s23, %s24
      %p33 = scmp.eq.s32.totalorder %s18, 0
      %p34 = por %p32, %p33
      %p35 = scmp.ne.s32.totalorder %s23, %s24
      %p36 = scmp.eq.s32.totalorder %s19, 2
      %p37 = por %p35, %p36
      %p39 = scmp.ne.s32.totalorder %s24, %s38
      %p40 = scmp.eq.s32.totalorder %s19, 0
      %p41 = por %p39, %p40
      %s42 = ssub.s32 %s13, %s20
      %p43 = scmp.eq.s32.totalorder %s42, 0
      %s45 = sadd.s32 %s44, 1
      %s46 = scalar_select %p43, %s44, %s45
      %p49 = pneg %p43
      %p50 = scmp.eq.s32.totalorder %s13, 2
      %p51 = por %p49, %p50
      %p52 = scmp.ne.s32.totalorder %s44, %s47
      %p53 = scmp.eq.s32.totalorder %s13, 0
      %p54 = por %p52, %p53
      %p55 = scmp.ne.s32.totalorder %s44, %s47
      %p56 = scmp.eq.s32.totalorder %s18, 2
      %p57 = por %p55, %p56
      %p58 = scmp.ne.s32.totalorder %s47, %s48
      %p59 = scmp.eq.s32.totalorder %s18, 0
      %p60 = por %p58, %p59
      %p61 = scmp.ne.s32.totalorder %s47, %s48
      %p62 = scmp.eq.s32.totalorder %s19, 2
      %p63 = por %p61, %p62
      %p65 = scmp.ne.s32.totalorder %s48, %s64
      %p66 = scmp.eq.s32.totalorder %s19, 0
      %p67 = por %p65, %p66
      %s68 = ssub.s32 %s13, %s20
      %p69 = scmp.eq.s32.totalorder %s68, 0
      %s71 = sadd.s32 %s70, 1
      %s72 = scalar_select %p69, %s70, %s71
      %p75 = pneg %p69
      %p76 = scmp.eq.s32.totalorder %s13, 2
      %p77 = por %p75, %p76
      %p78 = scmp.ne.s32.totalorder %s70, %s73
      %p79 = scmp.eq.s32.totalorder %s13, 0
      %p80 = por %p78, %p79
      %p81 = scmp.ne.s32.totalorder %s70, %s73
      %p82 = scmp.eq.s32.totalorder %s18, 2
      %p83 = por %p81, %p82
      %p84 = scmp.ne.s32.totalorder %s73, %s74
      %p85 = scmp.eq.s32.totalorder %s18, 0
      %p86 = por %p84, %p85
      %p87 = scmp.ne.s32.totalorder %s73, %s74
      %p88 = scmp.eq.s32.totalorder %s19, 2
      %p89 = por %p87, %p88
      %p91 = scmp.ne.s32.totalorder %s74, %s90
      %p92 = scmp.eq.s32.totalorder %s19, 0
      %p93 = por %p91, %p92
      %s94 = ssub.s32 %s13, %s20
      %p95 = scmp.eq.s32.totalorder %s94, 0
      %s97 = sadd.s32 %s96, 1
      %s98 = scalar_select %p95, %s96, %s97
      %p101 = pneg %p95
      %p102 = scmp.eq.s32.totalorder %s13, 2
      %p103 = por %p101, %p102
      %p104 = scmp.ne.s32.totalorder %s96, %s99
      %p105 = scmp.eq.s32.totalorder %s13, 0
      %p106 = por %p104, %p105
      %p107 = scmp.ne.s32.totalorder %s96, %s99
      %p108 = scmp.eq.s32.totalorder %s18, 2
      %p109 = por %p107, %p108
      %p110 = scmp.ne.s32.totalorder %s99, %s100
      %p111 = scmp.eq.s32.totalorder %s18, 0
      %p112 = por %p110, %p111
      %p113 = scmp.ne.s32.totalorder %s99, %s100
      %p114 = scmp.eq.s32.totalorder %s19, 2
      %p115 = por %p113, %p114
      %p117 = scmp.ne.s32.totalorder %s100, %s116
      %p118 = scmp.eq.s32.totalorder %s19, 0
      %p119 = por %p117, %p118
      %s120 = ssub.s32 %s13, %s20
      %p121 = scmp.eq.s32.totalorder %s120, 0
      %s123 = sadd.s32 %s122, 1
      %s124 = scalar_select %p121, %s122, %s123
      %p127 = pneg %p121
      %p128 = scmp.eq.s32.totalorder %s13, 2
      %p129 = por %p127, %p128
      %p130 = scmp.ne.s32.totalorder %s122, %s125
      %p131 = scmp.eq.s32.totalorder %s13, 0
      %p132 = por %p130, %p131
      %p133 = scmp.ne.s32.totalorder %s122, %s125
      %p134 = scmp.eq.s32.totalorder %s18, 2
      %p135 = por %p133, %p134
      %p136 = scmp.ne.s32.totalorder %s125, %s126
      %p137 = scmp.eq.s32.totalorder %s18, 0
      %p138 = por %p136, %p137
      %p139 = scmp.ne.s32.totalorder %s125, %s126
      %p140 = scmp.eq.s32.totalorder %s19, 2
      %p141 = por %p139, %p140
      %p143 = scmp.ne.s32.totalorder %s126, %s142
      %p144 = scmp.eq.s32.totalorder %s19, 0
      %p145 = por %p143, %p144
      %p146 = scmp.le.s32.totalorder 1, %s13
      %p147 = scmp.lt.s32.totalorder %s13, 4
      %p148 = pnand %p146, %p147
      %p149 = pneg %p148
      // Predicated region
      $region9: #{stacked_gru_cell.1} parent=5 // pred_check
        _
      $region10: #{stacked_gru_cell.1} parent=5 // pred_check_branch
        %151 = sbr.rel (%p148) target = $region12
      $region11: #{stacked_gru_cell.1} parent=5 // pred_region
        %s152 = ssub.s32 %s13, 1
        // Predicated region
        $region13: #{stacked_gru_cell.1} parent=11 // pred_check
          %p153 = pneg %p34
        $region14: #{stacked_gru_cell.1} parent=11 // pred_check_branch
          %155 = sbr.rel (%p153) target = $region16
        $region15: #{stacked_gru_cell.1} parent=11 // pred_region
          _
        $region16: #{stacked_gru_cell.1} parent=11 // pred_fallthru
          _
      $region12: #{stacked_gru_cell.1} parent=5 // pred_fallthru
        _
      %p156 = scmp.lt.s32.totalorder %s13, 3
      // Predicated region
      $region17: #{stacked_gru_cell.1} parent=5 // pred_check
        %p157 = pneg %p156
      $region18: #{stacked_gru_cell.1} parent=5 // pred_check_branch
        %159 = sbr.rel (%p157) target = $region20
      $region19: #{stacked_gru_cell.1} parent=5 // pred_region
        // Predicated region
        $region21: #{stacked_gru_cell.1} parent=19 // pred_check
          %p160 = pneg %p54
        $region22: #{stacked_gru_cell.1} parent=19 // pred_check_branch
          %162 = sbr.rel (%p160) target = $region24
        $region23: #{stacked_gru_cell.1} parent=19 // pred_region
          %p163 = scmp.lt.s32.totalorder %s13, 2
          %s164 = scalar_select %p163, %s13, 2
          %s165 = smul.addr %s164, 8
          %s166 = scalar_lea.vmem %s1, %s165
        $region24: #{stacked_gru_cell.1} parent=19 // pred_fallthru
          _
        // Predicated region
        $region25: #{stacked_gru_cell.1} parent=19 // pred_check
          %p167 = pneg %p80
        $region26: #{stacked_gru_cell.1} parent=19 // pred_check_branch
          %169 = sbr.rel (%p167) target = $region28
        $region27: #{stacked_gru_cell.1} parent=19 // pred_region
          %s170 = sand.u32 %s70, 1
          %s171 = scalar_lea.sflag [#allocation4], %s170
          %s172 = sand.u32 %s70, 1
          %s173 = smul.addr %s172, 512
          %s174 = scalar_lea.vmem [#allocation3], %s173
          %s176 = ssub.s32 8192, 8192
          %177 = vsyncadd %s171, %s176
          %s178 = smul.addr %s13, 128
          %s179 = smul.addr %s178, 64
          %s180 = scalar_lea.hbm %s2, %s179
          %s181 = sshll.u32 %s174, 4
          %s182 = int_to_ptr.vmem [resolvable:$true] %s181
          %187 = dma.hbm_to_vmem [thread:$0]  %s180, 8192, %s182, %s171, 256, 256, 16
        $region28: #{stacked_gru_cell.1} parent=19 // pred_fallthru
          _
        // Predicated region
        $region29: #{stacked_gru_cell.1} parent=19 // pred_check
          %p188 = pneg %p106
        $region30: #{stacked_gru_cell.1} parent=19 // pred_check_branch
          %190 = sbr.rel (%p188) target = $region32
        $region31: #{stacked_gru_cell.1} parent=19 // pred_region
          %p191 = scmp.lt.s32.totalorder %s13, 2
          %s192 = scalar_select %p191, %s13, 2
          %s193 = smul.addr %s192, 4
          %s194 = scalar_lea.vmem %s3, %s193
        $region32: #{stacked_gru_cell.1} parent=19 // pred_fallthru
          _
      $region20: #{stacked_gru_cell.1} parent=5 // pred_fallthru
        _
      %p195 = scmp.le.s32.totalorder 1, %s13
      %p196 = scmp.lt.s32.totalorder %s13, 4
      %p197 = pnand %p195, %p196
      %p198 = pneg %p197
      // Predicated region
      $region33: #{stacked_gru_cell.1} parent=5 // pred_check
        _
      $region34: #{stacked_gru_cell.1} parent=5 // pred_check_branch
        %200 = sbr.rel (%p197) target = $region36
      $region35: #{stacked_gru_cell.1} parent=5 // pred_region
        %s201 = ssub.s32 %s13, 1
        %s202 = sand.u32 %s73, 1
        %s203 = scalar_lea.sflag [#allocation4], %s202
        %s204 = sand.u32 %s73, 1
        %s205 = smul.addr %s204, 512
        %s206 = scalar_lea.vmem [#allocation3], %s205
        // Predicated region
        $region37: #{stacked_gru_cell.1} parent=35 // pred_check
          %p207 = pneg %p86
        $region38: #{stacked_gru_cell.1} parent=35 // pred_check_branch
          %209 = sbr.rel (%p207) target = $region40
        $region39: #{stacked_gru_cell.1} parent=35 // pred_region
          %210 = dma.done %s203, 8192
        $region40: #{stacked_gru_cell.1} parent=35 // pred_fallthru
          _
        %p211 = pneg %p34
        %p212 = pneg %p31
        %p213 = scmp.lt.s32.totalorder %s18, 2
        %s214 = scalar_select %p213, %s18, 2
        %s215 = smul.addr %s214, 8
        %s216 = scalar_lea.vmem %s1, %s215
        %p217 = pneg %p60
        %p218 = pneg %p57
        %s219 = sand.u32 %s73, 1
        %s220 = scalar_lea.sflag [#allocation4], %s219
        %s221 = sand.u32 %s73, 1
        %s222 = smul.addr %s221, 512
        %s223 = scalar_lea.vmem [#allocation3], %s222
        %p224 = pneg %p86
        %p225 = pneg %p83
        %p226 = scmp.lt.s32.totalorder %s18, 2
        %s227 = scalar_select %p226, %s18, 2
        %s228 = smul.addr %s227, 4
        %s229 = scalar_lea.vmem %s3, %s228
        %p230 = pneg %p112
        %p231 = pneg %p109
        %p232 = pneg %p138
        %p233 = pneg %p135
        %p234 = scmp.lt.s32.totalorder %s18, 2
        %s235 = scalar_select %p234, %s18, 2
        %s236 = smul.addr %s235, 8
        %s237 = scalar_lea.vmem %s4, %s236
        %p238 = scmp.lt.s32.totalorder %s18, 2
        %s239 = scalar_select %p238, %s18, 2
        %s240 = smul.addr %s239, 8
        %s241 = scalar_lea.vmem %s1, %s240
        %p242 = scmp.lt.s32.totalorder %s18, 2
        %s243 = scalar_select %p242, %s18, 2
        %s244 = smul.addr %s243, 4
        %s245 = scalar_lea.vmem %s3, %s244
        %p246 = scmp.lt.s32.totalorder %s18, 2
        %s247 = scalar_select %p246, %s18, 2
        %s248 = smul.addr %s247, 8
        %s249 = scalar_lea.vmem %s4, %s248
        %p250 = scmp.eq.s32.totalorder %s18, 0
        // Predicated region
        $region41: #{stacked_gru_cell.1} parent=35 // pred_check
          %p251 = pneg %p250
        $region42: #{stacked_gru_cell.1} parent=35 // pred_check_branch
          %253 = sbr.rel (%p251) target = $region44
        $region43: #{stacked_gru_cell.1} parent=35 // pred_region
          %v254 = vld [vmem:[%s0] sm:$0xff]
          %255 = vst [vmem:[#allocation2] sm:$0xff] %v254
        $region44: #{stacked_gru_cell.1} parent=35 // pred_fallthru
          _
        %v256 = vld [vmem:[%s241] sm:$0xff]
        %257 = vst [vmem:[#allocation2 + $0x8] sm:$0xff] %v256
        %v258 = vld [vmem:[#allocation2] sm:$0xff]
        %v259 = vld [vmem:[#allocation2 + $0x8] sm:$0xff]
        %v260 = vpack.c.bf16 %v258, %v258
        %v261 = vpack.c.bf16 %v259, %v259
        %v262 = vld [vmem:[%s206] sm:$0xff]
        %v263 = vld [vmem:[%s206 + $0x8] sm:$0xff]
        %v264 = vld [vmem:[%s206 + $0x10] sm:$0xff]
        %v265 = vld [vmem:[%s206 + $0x18] sm:$0xff]
        %v266 = vld [vmem:[%s206 + $0x20] sm:$0xff]
        %v267 = vld [vmem:[%s206 + $0x28] sm:$0xff]
        %v268 = vld [vmem:[%s206 + $0x30] sm:$0xff]
        %v269 = vld [vmem:[%s206 + $0x38] sm:$0xff]
        %v270 = vld [vmem:[%s206 + $0x40] sm:$0xff]
        %v271 = vld [vmem:[%s206 + $0x48] sm:$0xff]
        %v272 = vld [vmem:[%s206 + $0x50] sm:$0xff]
        %v273 = vld [vmem:[%s206 + $0x58] sm:$0xff]
        %v274 = vld [vmem:[%s206 + $0x60] sm:$0xff]
        %v275 = vld [vmem:[%s206 + $0x68] sm:$0xff]
        %v276 = vld [vmem:[%s206 + $0x70] sm:$0xff]
        %v277 = vld [vmem:[%s206 + $0x78] sm:$0xff]
        %v278 = vld [vmem:[%s206 + $0x80] sm:$0xff]
        %v279 = vld [vmem:[%s206 + $0x88] sm:$0xff]
        %v280 = vld [vmem:[%s206 + $0x90] sm:$0xff]
        %v281 = vld [vmem:[%s206 + $0x98] sm:$0xff]
        %v282 = vld [vmem:[%s206 + $0xa0] sm:$0xff]
        %v283 = vld [vmem:[%s206 + $0xa8] sm:$0xff]
        %v284 = vld [vmem:[%s206 + $0xb0] sm:$0xff]
        %v285 = vld [vmem:[%s206 + $0xb8] sm:$0xff]
        %v286 = vld [vmem:[%s206 + $0xc0] sm:$0xff]
        %v287 = vld [vmem:[%s206 + $0xc8] sm:$0xff]
        %v288 = vld [vmem:[%s206 + $0xd0] sm:$0xff]
        %v289 = vld [vmem:[%s206 + $0xd8] sm:$0xff]
        %v290 = vld [vmem:[%s206 + $0xe0] sm:$0xff]
        %v291 = vld [vmem:[%s206 + $0xe8] sm:$0xff]
        %v292 = vld [vmem:[%s206 + $0xf0] sm:$0xff]
        %v293 = vld [vmem:[%s206 + $0xf8] sm:$0xff]
        %v294 = vld [vmem:[%s206 + $0x100] sm:$0xff]
        %v295 = vld [vmem:[%s206 + $0x108] sm:$0xff]
        %v296 = vld [vmem:[%s206 + $0x110] sm:$0xff]
        %v297 = vld [vmem:[%s206 + $0x118] sm:$0xff]
        %v298 = vld [vmem:[%s206 + $0x120] sm:$0xff]
        %v299 = vld [vmem:[%s206 + $0x128] sm:$0xff]
        %v300 = vld [vmem:[%s206 + $0x130] sm:$0xff]
        %v301 = vld [vmem:[%s206 + $0x138] sm:$0xff]
        %v302 = vld [vmem:[%s206 + $0x140] sm:$0xff]
        %v303 = vld [vmem:[%s206 + $0x148] sm:$0xff]
        %v304 = vld [vmem:[%s206 + $0x150] sm:$0xff]
        %v305 = vld [vmem:[%s206 + $0x158] sm:$0xff]
        %v306 = vld [vmem:[%s206 + $0x160] sm:$0xff]
        %v307 = vld [vmem:[%s206 + $0x168] sm:$0xff]
        %v308 = vld [vmem:[%s206 + $0x170] sm:$0xff]
        %v309 = vld [vmem:[%s206 + $0x178] sm:$0xff]
        %v310 = vld [vmem:[%s206 + $0x180] sm:$0xff]
        %v311 = vld [vmem:[%s206 + $0x188] sm:$0xff]
        %v312 = vld [vmem:[%s206 + $0x190] sm:$0xff]
        %v313 = vld [vmem:[%s206 + $0x198] sm:$0xff]
        %v314 = vld [vmem:[%s206 + $0x1a0] sm:$0xff]
        %v315 = vld [vmem:[%s206 + $0x1a8] sm:$0xff]
        %v316 = vld [vmem:[%s206 + $0x1b0] sm:$0xff]
        %v317 = vld [vmem:[%s206 + $0x1b8] sm:$0xff]
        %v318 = vld [vmem:[%s206 + $0x1c0] sm:$0xff]
        %v319 = vld [vmem:[%s206 + $0x1c8] sm:$0xff]
        %v320 = vld [vmem:[%s206 + $0x1d0] sm:$0xff]
        %v321 = vld [vmem:[%s206 + $0x1d8] sm:$0xff]
        %v322 = vld [vmem:[%s206 + $0x1e0] sm:$0xff]
        %v323 = vld [vmem:[%s206 + $0x1e8] sm:$0xff]
        %v324 = vld [vmem:[%s206 + $0x1f0] sm:$0xff]
        %v325 = vld [vmem:[%s206 + $0x1f8] sm:$0xff]
        %v326 = vld [vmem:[%s245] sm:$0xf]
        %v328 = vlaneseq
        %v329 = vshrl.u32 %v328, 7
        %v330 = vsub.s32 0, %v329
        %v331 = vrot.slane %v326, %v330
        %v332 = vlaneseq
        %v333 = vshrl.u32 %v332, 7
        %v334 = vsub.s32 1, %v333
        %v335 = vrot.slane %v326, %v334
        %v336 = vlaneseq
        %v337 = vshrl.u32 %v336, 7
        %v338 = vsub.s32 2, %v337
        %v339 = vrot.slane %v326, %v338
        %v340 = vlaneseq
        %v341 = vshrl.u32 %v340, 7
        %v342 = vsub.s32 3, %v341
        %v343 = vrot.slane %v326, %v342
        %v412 = vunpack.c.l.b16 %v262
        %v413 = vunpack.c.h.b16 %v262
        %v414 = vunpack.c.l.b16 %v263
        %v415 = vunpack.c.h.b16 %v263
        %v416 = vunpack.c.l.b16 %v264
        %v417 = vunpack.c.h.b16 %v264
        %v418 = vunpack.c.l.b16 %v265
        %v419 = vunpack.c.h.b16 %v265
        %v420 = vunpack.c.l.b16 %v266
        %v421 = vunpack.c.h.b16 %v266
        %v422 = vunpack.c.l.b16 %v267
        %v423 = vunpack.c.h.b16 %v267
        %v424 = vunpack.c.l.b16 %v268
        %v425 = vunpack.c.h.b16 %v268
        %v426 = vunpack.c.l.b16 %v269
        %v427 = vunpack.c.h.b16 %v269
        %v428 = vunpack.c.l.b16 %v270
        %v429 = vunpack.c.h.b16 %v270
        %v430 = vunpack.c.l.b16 %v271
        %v431 = vunpack.c.h.b16 %v271
        %v432 = vunpack.c.l.b16 %v272
        %v433 = vunpack.c.h.b16 %v272
        %v434 = vunpack.c.l.b16 %v273
        %v435 = vunpack.c.h.b16 %v273
        %v436 = vunpack.c.l.b16 %v274
        %v437 = vunpack.c.h.b16 %v274
        %v438 = vunpack.c.l.b16 %v275
        %v439 = vunpack.c.h.b16 %v275
        %v440 = vunpack.c.l.b16 %v276
        %v441 = vunpack.c.h.b16 %v276
        %v442 = vunpack.c.l.b16 %v277
        %v443 = vunpack.c.h.b16 %v277
        %v444 = vunpack.c.l.b16 %v278
        %v445 = vunpack.c.h.b16 %v278
        %v446 = vunpack.c.l.b16 %v279
        %v447 = vunpack.c.h.b16 %v279
        %v448 = vunpack.c.l.b16 %v280
        %v449 = vunpack.c.h.b16 %v280
        %v450 = vunpack.c.l.b16 %v281
        %v451 = vunpack.c.h.b16 %v281
        %v452 = vunpack.c.l.b16 %v282
        %v453 = vunpack.c.h.b16 %v282
        %v454 = vunpack.c.l.b16 %v283
        %v455 = vunpack.c.h.b16 %v283
        %v456 = vunpack.c.l.b16 %v284
        %v457 = vunpack.c.h.b16 %v284
        %v458 = vunpack.c.l.b16 %v285
        %v459 = vunpack.c.h.b16 %v285
        %v460 = vunpack.c.l.b16 %v286
        %v461 = vunpack.c.h.b16 %v286
        %v462 = vunpack.c.l.b16 %v287
        %v463 = vunpack.c.h.b16 %v287
        %v464 = vunpack.c.l.b16 %v288
        %v465 = vunpack.c.h.b16 %v288
        %v466 = vunpack.c.l.b16 %v289
        %v467 = vunpack.c.h.b16 %v289
        %v468 = vunpack.c.l.b16 %v290
        %v469 = vunpack.c.h.b16 %v290
        %v470 = vunpack.c.l.b16 %v291
        %v471 = vunpack.c.h.b16 %v291
        %v472 = vunpack.c.l.b16 %v292
        %v473 = vunpack.c.h.b16 %v292
        %v474 = vunpack.c.l.b16 %v293
        %v475 = vunpack.c.h.b16 %v293
        %v476 = vunpack.c.l.b16 %v294
        %v477 = vunpack.c.h.b16 %v294
        %v478 = vunpack.c.l.b16 %v295
        %v479 = vunpack.c.h.b16 %v295
        %v480 = vunpack.c.l.b16 %v296
        %v481 = vunpack.c.h.b16 %v296
        %v482 = vunpack.c.l.b16 %v297
        %v483 = vunpack.c.h.b16 %v297
        %v484 = vunpack.c.l.b16 %v298
        %v485 = vunpack.c.h.b16 %v298
        %v486 = vunpack.c.l.b16 %v299
        %v487 = vunpack.c.h.b16 %v299
        %v488 = vunpack.c.l.b16 %v300
        %v489 = vunpack.c.h.b16 %v300
        %v490 = vunpack.c.l.b16 %v301
        %v491 = vunpack.c.h.b16 %v301
        %v492 = vunpack.c.l.b16 %v302
        %v493 = vunpack.c.h.b16 %v302
        %v494 = vunpack.c.l.b16 %v303
        %v495 = vunpack.c.h.b16 %v303
        %v496 = vunpack.c.l.b16 %v304
        %v497 = vunpack.c.h.b16 %v304
        %v498 = vunpack.c.l.b16 %v305
        %v499 = vunpack.c.h.b16 %v305
        %v500 = vunpack.c.l.b16 %v306
        %v501 = vunpack.c.h.b16 %v306
        %v502 = vunpack.c.l.b16 %v307
        %v503 = vunpack.c.h.b16 %v307
        %v504 = vunpack.c.l.b16 %v308
        %v505 = vunpack.c.h.b16 %v308
        %v506 = vunpack.c.l.b16 %v309
        %v507 = vunpack.c.h.b16 %v309
        %v508 = vunpack.c.l.b16 %v310
        %v509 = vunpack.c.h.b16 %v310
        %v510 = vunpack.c.l.b16 %v311
        %v511 = vunpack.c.h.b16 %v311
        %v512 = vunpack.c.l.b16 %v312
        %v513 = vunpack.c.h.b16 %v312
        %v514 = vunpack.c.l.b16 %v313
        %v515 = vunpack.c.h.b16 %v313
        %v516 = vunpack.c.l.b16 %v314
        %v517 = vunpack.c.h.b16 %v314
        %v518 = vunpack.c.l.b16 %v315
        %v519 = vunpack.c.h.b16 %v315
        %v520 = vunpack.c.l.b16 %v316
        %v521 = vunpack.c.h.b16 %v316
        %v522 = vunpack.c.l.b16 %v317
        %v523 = vunpack.c.h.b16 %v317
        %v524 = vunpack.c.l.b16 %v318
        %v525 = vunpack.c.h.b16 %v318
        %v526 = vunpack.c.l.b16 %v319
        %v527 = vunpack.c.h.b16 %v319
        %v528 = vunpack.c.l.b16 %v320
        %v529 = vunpack.c.h.b16 %v320
        %v530 = vunpack.c.l.b16 %v321
        %v531 = vunpack.c.h.b16 %v321
        %v532 = vunpack.c.l.b16 %v322
        %v533 = vunpack.c.h.b16 %v322
        %v534 = vunpack.c.l.b16 %v323
        %v535 = vunpack.c.h.b16 %v323
        %v536 = vunpack.c.l.b16 %v324
        %v537 = vunpack.c.h.b16 %v324
        %v538 = vunpack.c.l.b16 %v325
        %v539 = vunpack.c.h.b16 %v325
        %v540 = vpack.c.b16 %v416, %v412
        %v541 = vpack.c.b16 %v417, %v413
        %v542 = vpack.c.b16 %v418, %v414
        %v543 = vpack.c.b16 %v419, %v415
        %v544 = vpack.c.b16 %v424, %v420
        %v545 = vpack.c.b16 %v425, %v421
        %v546 = vpack.c.b16 %v426, %v422
        %v547 = vpack.c.b16 %v427, %v423
        %v548 = vpack.c.b16 %v432, %v428
        %v549 = vpack.c.b16 %v433, %v429
        %v550 = vpack.c.b16 %v434, %v430
        %v551 = vpack.c.b16 %v435, %v431
        %v552 = vpack.c.b16 %v440, %v436
        %v553 = vpack.c.b16 %v441, %v437
        %v554 = vpack.c.b16 %v442, %v438
        %v555 = vpack.c.b16 %v443, %v439
        %v556 = vpack.c.b16 %v448, %v444
        %v557 = vpack.c.b16 %v449, %v445
        %v558 = vpack.c.b16 %v450, %v446
        %v559 = vpack.c.b16 %v451, %v447
        %v560 = vpack.c.b16 %v456, %v452
        %v561 = vpack.c.b16 %v457, %v453
        %v562 = vpack.c.b16 %v458, %v454
        %v563 = vpack.c.b16 %v459, %v455
        %v564 = vpack.c.b16 %v464, %v460
        %v565 = vpack.c.b16 %v465, %v461
        %v566 = vpack.c.b16 %v466, %v462
        %v567 = vpack.c.b16 %v467, %v463
        %v568 = vpack.c.b16 %v472, %v468
        %v569 = vpack.c.b16 %v473, %v469
        %v570 = vpack.c.b16 %v474, %v470
        %v571 = vpack.c.b16 %v475, %v471
        %v572 = vpack.c.b16 %v480, %v476
        %v573 = vpack.c.b16 %v481, %v477
        %v574 = vpack.c.b16 %v482, %v478
        %v575 = vpack.c.b16 %v483, %v479
        %v576 = vpack.c.b16 %v488, %v484
        %v577 = vpack.c.b16 %v489, %v485
        %v578 = vpack.c.b16 %v490, %v486
        %v579 = vpack.c.b16 %v491, %v487
        %v580 = vpack.c.b16 %v496, %v492
        %v581 = vpack.c.b16 %v497, %v493
        %v582 = vpack.c.b16 %v498, %v494
        %v583 = vpack.c.b16 %v499, %v495
        %v584 = vpack.c.b16 %v504, %v500
        %v585 = vpack.c.b16 %v505, %v501
        %v586 = vpack.c.b16 %v506, %v502
        %v587 = vpack.c.b16 %v507, %v503
        %v588 = vpack.c.b16 %v512, %v508
        %v589 = vpack.c.b16 %v513, %v509
        %v590 = vpack.c.b16 %v514, %v510
        %v591 = vpack.c.b16 %v515, %v511
        %v592 = vpack.c.b16 %v520, %v516
        %v593 = vpack.c.b16 %v521, %v517
        %v594 = vpack.c.b16 %v522, %v518
        %v595 = vpack.c.b16 %v523, %v519
        %v596 = vpack.c.b16 %v528, %v524
        %v597 = vpack.c.b16 %v529, %v525
        %v598 = vpack.c.b16 %v530, %v526
        %v599 = vpack.c.b16 %v531, %v527
        %v600 = vpack.c.b16 %v536, %v532
        %v601 = vpack.c.b16 %v537, %v533
        %v602 = vpack.c.b16 %v538, %v534
        %v603 = vpack.c.b16 %v539, %v535
        %668 = vmatprep.subr.bf16.mxu0 %v541
        %669 = vmatpush1.bf16.msra.mxu0 %v540
        %670 = vmatprep.subr.bf16.mxu0 %v545
        %671 = vmatpush1.bf16.msra.mxu0 %v544
        %672 = vmatprep.subr.bf16.mxu0 %v549
        %673 = vmatpush1.bf16.msra.mxu0 %v548
        %674 = vmatprep.subr.bf16.mxu0 %v553
        %675 = vmatpush1.bf16.msra.mxu0 %v552
        %676 = vmatprep.subr.bf16.mxu0 %v557
        %677 = vmatpush1.bf16.msra.mxu0 %v556
        %678 = vmatprep.subr.bf16.mxu0 %v561
        %679 = vmatpush1.bf16.msra.mxu0 %v560
        %680 = vmatprep.subr.bf16.mxu0 %v565
        %681 = vmatpush1.bf16.msra.mxu0 %v564
        %682 = vmatprep.subr.bf16.mxu0 %v569
        %683 = vmatpush1.bf16.msra.mxu0 %v568
        %684 = vmatprep.subr.bf16.mxu0 %v573
        %685 = vmatpush1.bf16.msra.mxu0 %v572
        %686 = vmatprep.subr.bf16.mxu0 %v577
        %687 = vmatpush1.bf16.msra.mxu0 %v576
        %688 = vmatprep.subr.bf16.mxu0 %v581
        %689 = vmatpush1.bf16.msra.mxu0 %v580
        %690 = vmatprep.subr.bf16.mxu0 %v585
        %691 = vmatpush1.bf16.msra.mxu0 %v584
        %692 = vmatprep.subr.bf16.mxu0 %v589
        %693 = vmatpush1.bf16.msra.mxu0 %v588
        %694 = vmatprep.subr.bf16.mxu0 %v593
        %695 = vmatpush1.bf16.msra.mxu0 %v592
        %696 = vmatprep.subr.bf16.mxu0 %v597
        %697 = vmatpush1.bf16.msra.mxu0 %v596
        %698 = vmatprep.subr.bf16.mxu0 %v601
        %699 = vmatpush1.bf16.msra.mxu0 %v600
        %700 = vmatprep.mubr.bf16.mxu0 %v261
        %701 = vmatmul.mubr.bf16.gmra.mrb[0].mxu0 %v260
        %v702 = vpop.f32.mrb[0].mxu0
        %v703 = vadd.f32 %v331, %v702
        %v704 = vpop.f32.mrb[0].mxu0
        %v705 = vadd.f32 %v335, %v704
        %v706 = vpop.f32.mrb[0].mxu0
        %v707 = vpop.f32.mrb[0].mxu0
        %708 = vdwg.mxu0
        %709 = vmatprep.subr.bf16.mxu0 %v543
        %710 = vmatpush1.bf16.msra.mxu0 %v542
        %711 = vmatprep.subr.bf16.mxu0 %v547
        %712 = vmatpush1.bf16.msra.mxu0 %v546
        %713 = vmatprep.subr.bf16.mxu0 %v551
        %714 = vmatpush1.bf16.msra.mxu0 %v550
        %715 = vmatprep.subr.bf16.mxu0 %v555
        %716 = vmatpush1.bf16.msra.mxu0 %v554
        %717 = vmatprep.subr.bf16.mxu0 %v559
        %718 = vmatpush1.bf16.msra.mxu0 %v558
        %719 = vmatprep.subr.bf16.mxu0 %v563
        %720 = vmatpush1.bf16.msra.mxu0 %v562
        %721 = vmatprep.subr.bf16.mxu0 %v567
        %722 = vmatpush1.bf16.msra.mxu0 %v566
        %723 = vmatprep.subr.bf16.mxu0 %v571
        %724 = vmatpush1.bf16.msra.mxu0 %v570
        %725 = vmatprep.subr.bf16.mxu0 %v575
        %726 = vmatpush1.bf16.msra.mxu0 %v574
        %727 = vmatprep.subr.bf16.mxu0 %v579
        %728 = vmatpush1.bf16.msra.mxu0 %v578
        %729 = vmatprep.subr.bf16.mxu0 %v583
        %730 = vmatpush1.bf16.msra.mxu0 %v582
        %731 = vmatprep.subr.bf16.mxu0 %v587
        %732 = vmatpush1.bf16.msra.mxu0 %v586
        %733 = vmatprep.subr.bf16.mxu0 %v591
        %734 = vmatpush1.bf16.msra.mxu0 %v590
        %735 = vmatprep.subr.bf16.mxu0 %v595
        %736 = vmatpush1.bf16.msra.mxu0 %v594
        %737 = vmatprep.subr.bf16.mxu0 %v599
        %738 = vmatpush1.bf16.msra.mxu0 %v598
        %739 = vmatprep.subr.bf16.mxu0 %v603
        %740 = vmatpush1.bf16.msra.mxu0 %v602
        %741 = vmatprep.mubr.bf16.mxu0 %v261
        %742 = vmatmul.mubr.bf16.gmra.mrb[0].mxu0 %v260
        %v743 = vpop.f32.mrb[0].mxu0
        %v744 = vadd.f32 %v339, %v743
        %v745 = vpop.f32.mrb[0].mxu0
        %v746 = vadd.f32 %v343, %v745
        %v747 = vpop.f32.mrb[0].mxu0
        %v748 = vpop.f32.mrb[0].mxu0
        %749 = vdwg.mxu0
        %v750 = vxor.u32 %v703, 2147483648
        %v751 = vmul.f32 %v750, 1.442695
        %v752 = vpow.pop %v751
        %v753 = vadd.f32 %v752, 1.0
        %v754 = vrcp.pop %v753
        %v755 = vmul.f32 1.0, %v754
        %v756 = vxor.u32 %v705, 2147483648
        %v757 = vmul.f32 %v756, 1.442695
        %v758 = vpow.pop %v757
        %v759 = vadd.f32 %v758, 1.0
        %v760 = vrcp.pop %v759
        %v761 = vmul.f32 1.0, %v760
        %v762 = vmul.f32 %v755, %v746
        %v763 = vadd.f32 %v744, %v762
        %v764 = vtanh.pop %v763
        %v765 = vsub.f32 1.0, %v761
        %v766 = vmul.f32 %v765, %v764
        %v767 = vmul.f32 %v761, %v256
        %v768 = vadd.f32 %v766, %v767
        %769 = vst [vmem:[%s249] sm:$0xff] %v768
        %p770 = scmp.lt.s32.totalorder %s18, 2
        // Predicated region
        $region45: #{stacked_gru_cell.1} parent=35 // pred_check
          %p771 = pneg %p770
        $region46: #{stacked_gru_cell.1} parent=35 // pred_check_branch
          %773 = sbr.rel (%p771) target = $region48
        $region47: #{stacked_gru_cell.1} parent=35 // pred_region
          %774 = vst [vmem:[#allocation2] sm:$0xff] %v768
        $region48: #{stacked_gru_cell.1} parent=35 // pred_fallthru
          _
        %p775 = scmp.lt.s32.totalorder %s18, 2
        %s776 = scalar_select %p775, %s18, 2
        %s777 = smul.addr %s776, 8
        %s778 = scalar_lea.vmem %s4, %s777
        // Predicated region
        $region49: #{stacked_gru_cell.1} parent=35 // pred_check
          %p779 = pneg %p135
        $region50: #{stacked_gru_cell.1} parent=35 // pred_check_branch
          %781 = sbr.rel (%p779) target = $region52
        $region51: #{stacked_gru_cell.1} parent=35 // pred_region
          _
        $region52: #{stacked_gru_cell.1} parent=35 // pred_fallthru
          _
      $region36: #{stacked_gru_cell.1} parent=5 // pred_fallthru
        _
      %p782 = scmp.le.s32.totalorder 2, %s13
      // Predicated region
      $region53: #{stacked_gru_cell.1} parent=5 // pred_check
        %p783 = pneg %p782
      $region54: #{stacked_gru_cell.1} parent=5 // pred_check_branch
        %785 = sbr.rel (%p783) target = $region56
      $region55: #{stacked_gru_cell.1} parent=5 // pred_region
        %s786 = ssub.s32 %s13, 2
        // Predicated region
        $region57: #{stacked_gru_cell.1} parent=55 // pred_check
          %p787 = pneg %p141
        $region58: #{stacked_gru_cell.1} parent=55 // pred_check_branch
          %789 = sbr.rel (%p787) target = $region60
        $region59: #{stacked_gru_cell.1} parent=55 // pred_region
          %p790 = scmp.lt.s32.totalorder %s19, 2
          %s791 = scalar_select %p790, %s19, 2
          %s792 = smul.addr %s791, 8
          %s793 = scalar_lea.vmem %s4, %s792
        $region60: #{stacked_gru_cell.1} parent=55 // pred_fallthru
          _
      $region56: #{stacked_gru_cell.1} parent=5 // pred_fallthru
        _
    $region6: #{stacked_gru_cell.1} parent=1 // loop_footer
      %s17 = sadd.s32 1, %s13
    $region7: #{stacked_gru_cell.1} parent=1 // loop_footer_branch
      %12 = sbr.rel target = $region3
    $region8: #{stacked_gru_cell.1} parent=1 // loop_exit
      _
    %794 = vsyncpa [#allocation4], 1
    %s795 = scalar_lea.sflag [#allocation4], 1
    %796 = vsyncpa %s795, 1

</llo_original>
